<compile_context>
chip_gen: v7x
topology: tpu7x:2x2x1
jax: 0.10.0
libtpu: 0.0.40
codegen_flags: <defaults>
</compile_context>

<pallas_src>
import jax
import jax.numpy as jnp
from jax.experimental import pallas as pl
from jax.experimental.pallas import tpu as pltpu

LANE = 128


# --------------------------------------------------------------------------- #
# Kernel
# --------------------------------------------------------------------------- #
def aam_kernel(x_upd_ref, x_orig_ref, g_ref, w_avg_ref, w_hs_ref, b_hs_ref,
               o_ref):
    n = x_orig_ref.shape[1]

    def region_sum(ref):
        # (TB, N, Hd) bf16 -> (TB, Hd) f32, as N-1 VPU adds (keeps XLU free).
        acc = ref[:, 0, :].astype(jnp.float32)
        for k in range(1, n):
            acc = acc + ref[:, k, :].astype(jnp.float32)
        return acc

    sum_orig = region_sum(x_orig_ref)                    # (TB, Hd) f32
    avg_upd = region_sum(x_upd_ref) * (1.0 / 14.0)       # (TB, Hd) f32

    # S = sigmoid(Linear_S_avgPool(sum_orig/14) + G + Linear_S_qt(QT) + b)
    #   * /14 is folded into w_avg (prep step)
    #   * QT linear + both S biases are folded into g_ref (wrapper)
    lin_avg = jnp.dot(sum_orig.astype(jnp.bfloat16), w_avg_ref[...],
                      preferred_element_type=jnp.float32)        # MXU bf16
    S = jax.nn.sigmoid(lin_avg + g_ref[...])

    # H = sigmoid(Linear_H_S(S))
    H = jax.nn.sigmoid(
        jnp.dot(S.astype(jnp.bfloat16), w_hs_ref[...],
                preferred_element_type=jnp.float32) + b_hs_ref[...])

    # O = sigmoid(sum(x_update)/14) * H
    o_ref[...] = jax.nn.sigmoid(avg_upd) * H


# --------------------------------------------------------------------------- #
# Helpers
# --------------------------------------------------------------------------- #
def _pad_last(x, target):
    pad = target - x.shape[-1]
    if pad == 0:
        return x
    cfg = [(0, 0)] * (x.ndim - 1) + [(0, pad)]
    return jnp.pad(x, cfg)


def _tpu_vmem_bytes():
    """Physical VMEM per core; conservative 64 MiB (v7x) if the query fails."""
    cap = 64 * 1024 * 1024
    try:
        info = pltpu.get_tpu_info()
        queried = getattr(info, "vmem_capacity_bytes", None)
        if queried:
            cap = int(queried)
    except Exception:
        pass
    return cap


def _resident_spec(shape):
    """Constant-index (VMEM-resident) block; single-buffered where supported."""
    idx = lambda i: (0, 0)
    try:
        return pl.BlockSpec(shape, idx, pipeline_mode=pl.Buffered(buffer_count=1))
    except Exception:
        return pl.BlockSpec(shape, idx)


def _select_batch_tile(B, batch_tile):
    """Pick the batch tile; ensure >=2 grid steps (megacore) when B allows."""
    tb = min(B, batch_tile)
    if tb == B and B >= 16:
        half = (((B + 1) // 2) + 7) // 8 * 8   # ceil(B/2), sublane-aligned
        if 0 < half < B:
            tb = half
    return tb


# --------------------------------------------------------------------------- #
# One-time parameter preparation (hoisted out of the per-call forward path)
# --------------------------------------------------------------------------- #
def prepare_params(params):
    """Fold /14, pad to lane-dense 128-multiple, cast weights to bf16. Run once."""
    w_avg, b_avg, w_qt, b_qt, w_hs, b_hs = params
    Hd = w_avg.shape[0]
    Hd_p = ((Hd + LANE - 1) // LANE) * LANE

    w_avg_p = (jnp.zeros((Hd_p, Hd_p), jnp.bfloat16)
               .at[:Hd, :Hd].set((w_avg / 14.0).astype(jnp.bfloat16)))
    w_hs_p = (jnp.zeros((Hd_p, Hd_p), jnp.bfloat16)
              .at[:Hd, :Hd].set(w_hs.astype(jnp.bfloat16)))
    b_hs_p = _pad_last(b_hs.astype(jnp.float32), Hd_p)          # (1, Hd_p) f32
    b_s = (b_avg + b_qt).astype(jnp.float32)                    # folded into G
    return {
        "Hd": Hd, "Hd_p": Hd_p,
        "w_avg": w_avg_p, "w_hs": w_hs_p, "b_hs": b_hs_p,
        "w_qt": w_qt.astype(jnp.float32), "b_s": b_s,
    }


# --------------------------------------------------------------------------- #
# Forward
# --------------------------------------------------------------------------- #
def aam_forward(x_update, x_original, G, Question_Type, prepped,
                *, batch_tile=None, vmem_limit_bytes=None):
    B, N, Hd = x_update.shape
    assert Hd == prepped["Hd"], "params were prepared for a different HIDDEN"
    Hd_p = prepped["Hd_p"]

    # Dominant HBM streams in bf16 (no-op if upstream already produced bf16).
    # TODO(synk): for Hd not a multiple of 128 the pad below copies x in HBM;
    # fine for the tiny demo, a no-op for production HIDDEN (512/1024).
    x_upd = _pad_last(x_update.astype(jnp.bfloat16), Hd_p)
    x_orig = _pad_last(x_original.astype(jnp.bfloat16), Hd_p)

    # Fold the tiny (B,4)@(4,Hd) Question_Type linear + both S biases into G.
    g_eff = _pad_last(
        (G + Question_Type.astype(jnp.float32) @ prepped["w_qt"]
         + prepped["b_s"]).astype(jnp.float32), Hd_p)

    # Per-generation tuning: bigger tiles / higher VMEM limit on 128-MiB chips.
    vmem_cap = _tpu_vmem_bytes()
    if batch_tile is None:
        batch_tile = 256 if vmem_cap >= 96 * 1024 * 1024 else 128
    if vmem_limit_bytes is None:
        vmem_limit_bytes = min(vmem_cap * 3 // 4, 96 * 1024 * 1024)

    TB = _select_batch_tile(B, batch_tile)
    grid = (pl.cdiv(B, TB),)

    x_spec = pl.BlockSpec((TB, N, Hd_p), lambda i: (i, 0, 0))
    row_spec = pl.BlockSpec((TB, Hd_p), lambda i: (i, 0))

    out_p = pl.pallas_call(
        aam_kernel,
        out_shape=jax.ShapeDtypeStruct((B, Hd_p), jnp.float32),
        grid_spec=pl.GridSpec(
            grid=grid,
            in_specs=[
                x_spec,                          # x_update  (bf16)
                x_spec,                          # x_original(bf16)
                row_spec,                        # G_eff     (f32)
                _resident_spec((Hd_p, Hd_p)),    # W_S_avgPool / 14  (bf16)
                _resident_spec((Hd_p, Hd_p)),    # W_H_S             (bf16)
                _resident_spec((1, Hd_p)),       # b_H_S             (f32)
            ],
            out_specs=row_spec,
        ),
        compiler_params=pltpu.CompilerParams(
            dimension_semantics=("parallel",),   # megacore on v7x
            vmem_limit_bytes=int(vmem_limit_bytes),
        ),
    )(x_upd, x_orig, g_eff, prepped["w_avg"], prepped["w_hs"], prepped["b_hs"])

    return out_p[:, :Hd] if Hd_p != Hd else out_p


# --------------------------------------------------------------------------- #
# Synthetic parameters (nn.Linear-style init), raw f32 / (in, out) layout
# --------------------------------------------------------------------------- #
def init_params(key, hidden):
    ks = jax.random.split(key, 6)

    def lin(kw, kb, fan_in, fan_out):
        bound = 1.0 / jnp.sqrt(fan_in)
        w = jax.random.uniform(kw, (fan_in, fan_out), jnp.float32, -bound, bound)
        b = jax.random.uniform(kb, (1, fan_out), jnp.float32, -bound, bound)
        return w, b

    w_avg, b_avg = lin(ks[0], ks[1], hidden, hidden)   # linear_S_avgPool
    w_qt,  b_qt  = lin(ks[2], ks[3], 4, hidden)        # linear_S_qt
    w_hs,  b_hs  = lin(ks[4], ks[5], hidden, hidden)   # linear_H_S
    # TODO(synk): linear_g_H exists in __init__ but is unused in forward -> not created.
    return (w_avg, b_avg, w_qt, b_qt, w_hs, b_hs)


if __name__ == "__main__":
    B, N, HIDDEN = 2, 14, 32   # 14 regions matches the hard-coded /14

    key = jax.random.PRNGKey(0)
    k1, k2, k3, k4, kp = jax.random.split(key, 5)
    x_update = jax.random.normal(k1, (B, N, HIDDEN), jnp.float32)
    x_original = jax.random.normal(k2, (B, N, HIDDEN), jnp.float32)
    G = jax.random.normal(k3, (B, HIDDEN), jnp.float32)
    Question_Type = jax.random.normal(k4, (B, 4), jnp.float32)

    params = init_params(kp, HIDDEN)
    prepped = prepare_params(params)          # one-time weight prep (hoisted)

    out = aam_forward(x_update, x_original, G, Question_Type, prepped)
    jax.block_until_ready(out)

    # Pure-JAX f32 reference (mirrors the PyTorch forward). bf16 kernel -> use
    # relaxed tolerances per the numerics note in the review.
    w_avg, b_avg, w_qt, b_qt, w_hs, b_hs = params
    avg_o = jnp.sum(x_original, axis=1) / 14.0
    avg_u = jnp.sum(x_update, axis=1) / 14.0
    S = jax.nn.sigmoid(avg_o @ w_avg + b_avg + G + Question_Type @ w_qt + b_qt)
    Hh = jax.nn.sigmoid(S @ w_hs + b_hs)
    ref = jax.nn.sigmoid(avg_u) * Hh

    assert out.shape == (B, HIDDEN)
    assert jnp.allclose(out, ref, atol=2e-2, rtol=2e-2), \
        f"max abs err {jnp.max(jnp.abs(out - ref))}"

    print("KERNEL_OK")
</pallas_src>

<mosaic_0001>
module attributes {stable_mosaic.version = 11 : i64} {
  func.func @aam_kernel(%arg0: i32, %arg1: memref<2x14x128xbf16, #tpu.memory_space<vmem>>, %arg2: memref<2x14x128xbf16, #tpu.memory_space<vmem>>, %arg3: memref<2x128xf32, #tpu.memory_space<vmem>>, %arg4: memref<128x128xbf16, #tpu.memory_space<vmem>>, %arg5: memref<128x128xbf16, #tpu.memory_space<vmem>>, %arg6: memref<1x128xf32, #tpu.memory_space<vmem>>, %arg7: memref<2x128xf32, #tpu.memory_space<vmem>>) attributes {dimension_semantics = [#tpu.dimension_semantics<parallel>], iteration_bounds = array<i64: 1>, scalar_prefetch = 0 : i64, scratch_operands = 0 : i64, tpu.core_type = #tpu.core_type<tc>, window_params = [{transform_indices = @transform_0, window_bounds = array<i64: 2, 14, 128>}, {transform_indices = @transform_1, window_bounds = array<i64: 2, 14, 128>}, {transform_indices = @transform_2, window_bounds = array<i64: 2, 128>}, {pipeline_mode = #tpu.pipeline_mode<synchronous>, transform_indices = @transform_3, window_bounds = array<i64: 128, 128>}, {pipeline_mode = #tpu.pipeline_mode<synchronous>, transform_indices = @transform_4, window_bounds = array<i64: 128, 128>}, {pipeline_mode = #tpu.pipeline_mode<synchronous>, transform_indices = @transform_5, window_bounds = array<i64: 1, 128>}, {transform_indices = @transform_6, window_bounds = array<i64: 2, 128>}]} {
    %c0 = arith.constant 0 : index
    %c0_0 = arith.constant 0 : index
    %c0_1 = arith.constant 0 : index
    %0 = vector.load %arg2[%c0, %c0_0, %c0_1] : memref<2x14x128xbf16, #tpu.memory_space<vmem>>, vector<2x1x128xbf16>
    %1 = vector.shape_cast %0 : vector<2x1x128xbf16> to vector<2x128xbf16>
    %2 = arith.extf %1 : vector<2x128xbf16> to vector<2x128xf32>
    %c0_2 = arith.constant 0 : index
    %c1 = arith.constant 1 : index
    %c0_3 = arith.constant 0 : index
    %3 = vector.load %arg2[%c0_2, %c1, %c0_3] : memref<2x14x128xbf16, #tpu.memory_space<vmem>>, vector<2x1x128xbf16>
    %4 = vector.shape_cast %3 : vector<2x1x128xbf16> to vector<2x128xbf16>
    %5 = arith.extf %4 : vector<2x128xbf16> to vector<2x128xf32>
    %6 = arith.addf %2, %5 : vector<2x128xf32>
    %c0_4 = arith.constant 0 : index
    %c2 = arith.constant 2 : index
    %c0_5 = arith.constant 0 : index
    %7 = vector.load %arg2[%c0_4, %c2, %c0_5] : memref<2x14x128xbf16, #tpu.memory_space<vmem>>, vector<2x1x128xbf16>
    %8 = vector.shape_cast %7 : vector<2x1x128xbf16> to vector<2x128xbf16>
    %9 = arith.extf %8 : vector<2x128xbf16> to vector<2x128xf32>
    %10 = arith.addf %6, %9 : vector<2x128xf32>
    %c0_6 = arith.constant 0 : index
    %c3 = arith.constant 3 : index
    %c0_7 = arith.constant 0 : index
    %11 = vector.load %arg2[%c0_6, %c3, %c0_7] : memref<2x14x128xbf16, #tpu.memory_space<vmem>>, vector<2x1x128xbf16>
    %12 = vector.shape_cast %11 : vector<2x1x128xbf16> to vector<2x128xbf16>
    %13 = arith.extf %12 : vector<2x128xbf16> to vector<2x128xf32>
    %14 = arith.addf %10, %13 : vector<2x128xf32>
    %c0_8 = arith.constant 0 : index
    %c4 = arith.constant 4 : index
    %c0_9 = arith.constant 0 : index
    %15 = vector.load %arg2[%c0_8, %c4, %c0_9] : memref<2x14x128xbf16, #tpu.memory_space<vmem>>, vector<2x1x128xbf16>
    %16 = vector.shape_cast %15 : vector<2x1x128xbf16> to vector<2x128xbf16>
    %17 = arith.extf %16 : vector<2x128xbf16> to vector<2x128xf32>
    %18 = arith.addf %14, %17 : vector<2x128xf32>
    %c0_10 = arith.constant 0 : index
    %c5 = arith.constant 5 : index
    %c0_11 = arith.constant 0 : index
    %19 = vector.load %arg2[%c0_10, %c5, %c0_11] : memref<2x14x128xbf16, #tpu.memory_space<vmem>>, vector<2x1x128xbf16>
    %20 = vector.shape_cast %19 : vector<2x1x128xbf16> to vector<2x128xbf16>
    %21 = arith.extf %20 : vector<2x128xbf16> to vector<2x128xf32>
    %22 = arith.addf %18, %21 : vector<2x128xf32>
    %c0_12 = arith.constant 0 : index
    %c6 = arith.constant 6 : index
    %c0_13 = arith.constant 0 : index
    %23 = vector.load %arg2[%c0_12, %c6, %c0_13] : memref<2x14x128xbf16, #tpu.memory_space<vmem>>, vector<2x1x128xbf16>
    %24 = vector.shape_cast %23 : vector<2x1x128xbf16> to vector<2x128xbf16>
    %25 = arith.extf %24 : vector<2x128xbf16> to vector<2x128xf32>
    %26 = arith.addf %22, %25 : vector<2x128xf32>
    %c0_14 = arith.constant 0 : index
    %c7 = arith.constant 7 : index
    %c0_15 = arith.constant 0 : index
    %27 = vector.load %arg2[%c0_14, %c7, %c0_15] : memref<2x14x128xbf16, #tpu.memory_space<vmem>>, vector<2x1x128xbf16>
    %28 = vector.shape_cast %27 : vector<2x1x128xbf16> to vector<2x128xbf16>
    %29 = arith.extf %28 : vector<2x128xbf16> to vector<2x128xf32>
    %30 = arith.addf %26, %29 : vector<2x128xf32>
    %c0_16 = arith.constant 0 : index
    %c8 = arith.constant 8 : index
    %c0_17 = arith.constant 0 : index
    %31 = vector.load %arg2[%c0_16, %c8, %c0_17] : memref<2x14x128xbf16, #tpu.memory_space<vmem>>, vector<2x1x128xbf16>
    %32 = vector.shape_cast %31 : vector<2x1x128xbf16> to vector<2x128xbf16>
    %33 = arith.extf %32 : vector<2x128xbf16> to vector<2x128xf32>
    %34 = arith.addf %30, %33 : vector<2x128xf32>
    %c0_18 = arith.constant 0 : index
    %c9 = arith.constant 9 : index
    %c0_19 = arith.constant 0 : index
    %35 = vector.load %arg2[%c0_18, %c9, %c0_19] : memref<2x14x128xbf16, #tpu.memory_space<vmem>>, vector<2x1x128xbf16>
    %36 = vector.shape_cast %35 : vector<2x1x128xbf16> to vector<2x128xbf16>
    %37 = arith.extf %36 : vector<2x128xbf16> to vector<2x128xf32>
    %38 = arith.addf %34, %37 : vector<2x128xf32>
    %c0_20 = arith.constant 0 : index
    %c10 = arith.constant 10 : index
    %c0_21 = arith.constant 0 : index
    %39 = vector.load %arg2[%c0_20, %c10, %c0_21] : memref<2x14x128xbf16, #tpu.memory_space<vmem>>, vector<2x1x128xbf16>
    %40 = vector.shape_cast %39 : vector<2x1x128xbf16> to vector<2x128xbf16>
    %41 = arith.extf %40 : vector<2x128xbf16> to vector<2x128xf32>
    %42 = arith.addf %38, %41 : vector<2x128xf32>
    %c0_22 = arith.constant 0 : index
    %c11 = arith.constant 11 : index
    %c0_23 = arith.constant 0 : index
    %43 = vector.load %arg2[%c0_22, %c11, %c0_23] : memref<2x14x128xbf16, #tpu.memory_space<vmem>>, vector<2x1x128xbf16>
    %44 = vector.shape_cast %43 : vector<2x1x128xbf16> to vector<2x128xbf16>
    %45 = arith.extf %44 : vector<2x128xbf16> to vector<2x128xf32>
    %46 = arith.addf %42, %45 : vector<2x128xf32>
    %c0_24 = arith.constant 0 : index
    %c12 = arith.constant 12 : index
    %c0_25 = arith.constant 0 : index
    %47 = vector.load %arg2[%c0_24, %c12, %c0_25] : memref<2x14x128xbf16, #tpu.memory_space<vmem>>, vector<2x1x128xbf16>
    %48 = vector.shape_cast %47 : vector<2x1x128xbf16> to vector<2x128xbf16>
    %49 = arith.extf %48 : vector<2x128xbf16> to vector<2x128xf32>
    %50 = arith.addf %46, %49 : vector<2x128xf32>
    %c0_26 = arith.constant 0 : index
    %c13 = arith.constant 13 : index
    %c0_27 = arith.constant 0 : index
    %51 = vector.load %arg2[%c0_26, %c13, %c0_27] : memref<2x14x128xbf16, #tpu.memory_space<vmem>>, vector<2x1x128xbf16>
    %52 = vector.shape_cast %51 : vector<2x1x128xbf16> to vector<2x128xbf16>
    %53 = arith.extf %52 : vector<2x128xbf16> to vector<2x128xf32>
    %54 = arith.addf %50, %53 : vector<2x128xf32>
    %c0_28 = arith.constant 0 : index
    %c0_29 = arith.constant 0 : index
    %c0_30 = arith.constant 0 : index
    %55 = vector.load %arg1[%c0_28, %c0_29, %c0_30] : memref<2x14x128xbf16, #tpu.memory_space<vmem>>, vector<2x1x128xbf16>
    %56 = vector.shape_cast %55 : vector<2x1x128xbf16> to vector<2x128xbf16>
    %57 = arith.extf %56 : vector<2x128xbf16> to vector<2x128xf32>
    %c0_31 = arith.constant 0 : index
    %c1_32 = arith.constant 1 : index
    %c0_33 = arith.constant 0 : index
    %58 = vector.load %arg1[%c0_31, %c1_32, %c0_33] : memref<2x14x128xbf16, #tpu.memory_space<vmem>>, vector<2x1x128xbf16>
    %59 = vector.shape_cast %58 : vector<2x1x128xbf16> to vector<2x128xbf16>
    %60 = arith.extf %59 : vector<2x128xbf16> to vector<2x128xf32>
    %61 = arith.addf %57, %60 : vector<2x128xf32>
    %c0_34 = arith.constant 0 : index
    %c2_35 = arith.constant 2 : index
    %c0_36 = arith.constant 0 : index
    %62 = vector.load %arg1[%c0_34, %c2_35, %c0_36] : memref<2x14x128xbf16, #tpu.memory_space<vmem>>, vector<2x1x128xbf16>
    %63 = vector.shape_cast %62 : vector<2x1x128xbf16> to vector<2x128xbf16>
    %64 = arith.extf %63 : vector<2x128xbf16> to vector<2x128xf32>
    %65 = arith.addf %61, %64 : vector<2x128xf32>
    %c0_37 = arith.constant 0 : index
    %c3_38 = arith.constant 3 : index
    %c0_39 = arith.constant 0 : index
    %66 = vector.load %arg1[%c0_37, %c3_38, %c0_39] : memref<2x14x128xbf16, #tpu.memory_space<vmem>>, vector<2x1x128xbf16>
    %67 = vector.shape_cast %66 : vector<2x1x128xbf16> to vector<2x128xbf16>
    %68 = arith.extf %67 : vector<2x128xbf16> to vector<2x128xf32>
    %69 = arith.addf %65, %68 : vector<2x128xf32>
    %c0_40 = arith.constant 0 : index
    %c4_41 = arith.constant 4 : index
    %c0_42 = arith.constant 0 : index
    %70 = vector.load %arg1[%c0_40, %c4_41, %c0_42] : memref<2x14x128xbf16, #tpu.memory_space<vmem>>, vector<2x1x128xbf16>
    %71 = vector.shape_cast %70 : vector<2x1x128xbf16> to vector<2x128xbf16>
    %72 = arith.extf %71 : vector<2x128xbf16> to vector<2x128xf32>
    %73 = arith.addf %69, %72 : vector<2x128xf32>
    %c0_43 = arith.constant 0 : index
    %c5_44 = arith.constant 5 : index
    %c0_45 = arith.constant 0 : index
    %74 = vector.load %arg1[%c0_43, %c5_44, %c0_45] : memref<2x14x128xbf16, #tpu.memory_space<vmem>>, vector<2x1x128xbf16>
    %75 = vector.shape_cast %74 : vector<2x1x128xbf16> to vector<2x128xbf16>
    %76 = arith.extf %75 : vector<2x128xbf16> to vector<2x128xf32>
    %77 = arith.addf %73, %76 : vector<2x128xf32>
    %c0_46 = arith.constant 0 : index
    %c6_47 = arith.constant 6 : index
    %c0_48 = arith.constant 0 : index
    %78 = vector.load %arg1[%c0_46, %c6_47, %c0_48] : memref<2x14x128xbf16, #tpu.memory_space<vmem>>, vector<2x1x128xbf16>
    %79 = vector.shape_cast %78 : vector<2x1x128xbf16> to vector<2x128xbf16>
    %80 = arith.extf %79 : vector<2x128xbf16> to vector<2x128xf32>
    %81 = arith.addf %77, %80 : vector<2x128xf32>
    %c0_49 = arith.constant 0 : index
    %c7_50 = arith.constant 7 : index
    %c0_51 = arith.constant 0 : index
    %82 = vector.load %arg1[%c0_49, %c7_50, %c0_51] : memref<2x14x128xbf16, #tpu.memory_space<vmem>>, vector<2x1x128xbf16>
    %83 = vector.shape_cast %82 : vector<2x1x128xbf16> to vector<2x128xbf16>
    %84 = arith.extf %83 : vector<2x128xbf16> to vector<2x128xf32>
    %85 = arith.addf %81, %84 : vector<2x128xf32>
    %c0_52 = arith.constant 0 : index
    %c8_53 = arith.constant 8 : index
    %c0_54 = arith.constant 0 : index
    %86 = vector.load %arg1[%c0_52, %c8_53, %c0_54] : memref<2x14x128xbf16, #tpu.memory_space<vmem>>, vector<2x1x128xbf16>
    %87 = vector.shape_cast %86 : vector<2x1x128xbf16> to vector<2x128xbf16>
    %88 = arith.extf %87 : vector<2x128xbf16> to vector<2x128xf32>
    %89 = arith.addf %85, %88 : vector<2x128xf32>
    %c0_55 = arith.constant 0 : index
    %c9_56 = arith.constant 9 : index
    %c0_57 = arith.constant 0 : index
    %90 = vector.load %arg1[%c0_55, %c9_56, %c0_57] : memref<2x14x128xbf16, #tpu.memory_space<vmem>>, vector<2x1x128xbf16>
    %91 = vector.shape_cast %90 : vector<2x1x128xbf16> to vector<2x128xbf16>
    %92 = arith.extf %91 : vector<2x128xbf16> to vector<2x128xf32>
    %93 = arith.addf %89, %92 : vector<2x128xf32>
    %c0_58 = arith.constant 0 : index
    %c10_59 = arith.constant 10 : index
    %c0_60 = arith.constant 0 : index
    %94 = vector.load %arg1[%c0_58, %c10_59, %c0_60] : memref<2x14x128xbf16, #tpu.memory_space<vmem>>, vector<2x1x128xbf16>
    %95 = vector.shape_cast %94 : vector<2x1x128xbf16> to vector<2x128xbf16>
    %96 = arith.extf %95 : vector<2x128xbf16> to vector<2x128xf32>
    %97 = arith.addf %93, %96 : vector<2x128xf32>
    %c0_61 = arith.constant 0 : index
    %c11_62 = arith.constant 11 : index
    %c0_63 = arith.constant 0 : index
    %98 = vector.load %arg1[%c0_61, %c11_62, %c0_63] : memref<2x14x128xbf16, #tpu.memory_space<vmem>>, vector<2x1x128xbf16>
    %99 = vector.shape_cast %98 : vector<2x1x128xbf16> to vector<2x128xbf16>
    %100 = arith.extf %99 : vector<2x128xbf16> to vector<2x128xf32>
    %101 = arith.addf %97, %100 : vector<2x128xf32>
    %c0_64 = arith.constant 0 : index
    %c12_65 = arith.constant 12 : index
    %c0_66 = arith.constant 0 : index
    %102 = vector.load %arg1[%c0_64, %c12_65, %c0_66] : memref<2x14x128xbf16, #tpu.memory_space<vmem>>, vector<2x1x128xbf16>
    %103 = vector.shape_cast %102 : vector<2x1x128xbf16> to vector<2x128xbf16>
    %104 = arith.extf %103 : vector<2x128xbf16> to vector<2x128xf32>
    %105 = arith.addf %101, %104 : vector<2x128xf32>
    %c0_67 = arith.constant 0 : index
    %c13_68 = arith.constant 13 : index
    %c0_69 = arith.constant 0 : index
    %106 = vector.load %arg1[%c0_67, %c13_68, %c0_69] : memref<2x14x128xbf16, #tpu.memory_space<vmem>>, vector<2x1x128xbf16>
    %107 = vector.shape_cast %106 : vector<2x1x128xbf16> to vector<2x128xbf16>
    %108 = arith.extf %107 : vector<2x128xbf16> to vector<2x128xf32>
    %109 = arith.addf %105, %108 : vector<2x128xf32>
    %cst = arith.constant 0.0714285746 : f32
    %110 = vector.broadcast %cst : f32 to vector<2x128xf32>
    %111 = arith.mulf %109, %110 : vector<2x128xf32>
    %112 = arith.truncf %54 : vector<2x128xf32> to vector<2x128xbf16>
    %c0_70 = arith.constant 0 : index
    %c0_71 = arith.constant 0 : index
    %113 = vector.load %arg4[%c0_70, %c0_71] : memref<128x128xbf16, #tpu.memory_space<vmem>>, vector<128x128xbf16>
    %cst_72 = arith.constant dense<0.000000e+00> : vector<2x128xf32>
    %114 = tpu.matmul %112, %113, %cst_72 {dimension_numbers = #tpu.dot_dimension_numbers<[1], [0], [0], [1], [0, 0, 1, 1], [], []>} : vector<2x128xbf16>, vector<128x128xbf16>, vector<2x128xf32> -> vector<2x128xf32>
    %c0_73 = arith.constant 0 : index
    %c0_74 = arith.constant 0 : index
    %115 = vector.load %arg3[%c0_73, %c0_74] : memref<2x128xf32, #tpu.memory_space<vmem>>, vector<2x128xf32>
    %116 = arith.addf %114, %115 : vector<2x128xf32>
    %117 = arith.negf %116 : vector<2x128xf32>
    %118 = math.exp %117 : vector<2x128xf32>
    %cst_75 = arith.constant 1.000000e+00 : f32
    %119 = vector.broadcast %cst_75 : f32 to vector<2x128xf32>
    %120 = arith.addf %119, %118 : vector<2x128xf32>
    %121 = arith.divf %119, %120 : vector<2x128xf32>
    %122 = arith.truncf %121 : vector<2x128xf32> to vector<2x128xbf16>
    %c0_76 = arith.constant 0 : index
    %c0_77 = arith.constant 0 : index
    %123 = vector.load %arg5[%c0_76, %c0_77] : memref<128x128xbf16, #tpu.memory_space<vmem>>, vector<128x128xbf16>
    %cst_78 = arith.constant dense<0.000000e+00> : vector<2x128xf32>
    %124 = tpu.matmul %122, %123, %cst_78 {dimension_numbers = #tpu.dot_dimension_numbers<[1], [0], [0], [1], [0, 0, 1, 1], [], []>} : vector<2x128xbf16>, vector<128x128xbf16>, vector<2x128xf32> -> vector<2x128xf32>
    %c0_79 = arith.constant 0 : index
    %c0_80 = arith.constant 0 : index
    %125 = vector.load %arg6[%c0_79, %c0_80] : memref<1x128xf32, #tpu.memory_space<vmem>>, vector<1x128xf32>
    %126 = vector.broadcast %125 : vector<1x128xf32> to vector<2x128xf32>
    %127 = arith.addf %124, %126 : vector<2x128xf32>
    %128 = arith.negf %127 : vector<2x128xf32>
    %129 = math.exp %128 : vector<2x128xf32>
    %cst_81 = arith.constant 1.000000e+00 : f32
    %130 = vector.broadcast %cst_81 : f32 to vector<2x128xf32>
    %131 = arith.addf %130, %129 : vector<2x128xf32>
    %132 = arith.divf %130, %131 : vector<2x128xf32>
    %133 = arith.negf %111 : vector<2x128xf32>
    %134 = math.exp %133 : vector<2x128xf32>
    %cst_82 = arith.constant 1.000000e+00 : f32
    %135 = vector.broadcast %cst_82 : f32 to vector<2x128xf32>
    %136 = arith.addf %135, %134 : vector<2x128xf32>
    %137 = arith.divf %135, %136 : vector<2x128xf32>
    %138 = arith.mulf %137, %132 : vector<2x128xf32>
    %c0_83 = arith.constant 0 : index
    %c0_84 = arith.constant 0 : index
    %139 = vector.load %arg7[%c0_83, %c0_84] : memref<2x128xf32, #tpu.memory_space<vmem>>, vector<2x128xf32>
    tpu.vector_store %arg7[%c0_83, %c0_84], %138 {strides = array<i32>} : memref<2x128xf32, #tpu.memory_space<vmem>>, vector<2x128xf32>,
    return
  }
  func.func @transform_0(%arg0: i32) -> (i32, i32, i32) {
    %c0_i32 = arith.constant 0 : i32
    %c0_i32_0 = arith.constant 0 : i32
    %c0_i32_1 = arith.constant 0 : i32
    return %arg0, %c0_i32, %c0_i32_0 : i32, i32, i32
  }
  func.func @transform_1(%arg0: i32) -> (i32, i32, i32) {
    %c0_i32 = arith.constant 0 : i32
    %c0_i32_0 = arith.constant 0 : i32
    %c0_i32_1 = arith.constant 0 : i32
    return %arg0, %c0_i32, %c0_i32_0 : i32, i32, i32
  }
  func.func @transform_2(%arg0: i32) -> (i32, i32) {
    %c0_i32 = arith.constant 0 : i32
    %c0_i32_0 = arith.constant 0 : i32
    return %arg0, %c0_i32 : i32, i32
  }
  func.func @transform_3(%arg0: i32) -> (i32, i32) {
    %c0_i32 = arith.constant 0 : i32
    %c0_i32_0 = arith.constant 0 : i32
    %c0_i32_1 = arith.constant 0 : i32
    return %c0_i32, %c0_i32_0 : i32, i32
  }
  func.func @transform_4(%arg0: i32) -> (i32, i32) {
    %c0_i32 = arith.constant 0 : i32
    %c0_i32_0 = arith.constant 0 : i32
    %c0_i32_1 = arith.constant 0 : i32
    return %c0_i32, %c0_i32_0 : i32, i32
  }
  func.func @transform_5(%arg0: i32) -> (i32, i32) {
    %c0_i32 = arith.constant 0 : i32
    %c0_i32_0 = arith.constant 0 : i32
    %c0_i32_1 = arith.constant 0 : i32
    return %c0_i32, %c0_i32_0 : i32, i32
  }
  func.func @transform_6(%arg0: i32) -> (i32, i32) {
    %c0_i32 = arith.constant 0 : i32
    %c0_i32_0 = arith.constant 0 : i32
    return %arg0, %c0_i32 : i32, i32
  }
}

</mosaic_0001>

<llo_original>
// kernel: tpu_custom_call.1
$region0: #{tpu_custom_call.1}
  #allocation0 [shape = 'u32[]', space=smem, size = 0x4, offset = 0x4, fixed_abs, tag = 'smem constant byte address 0x4 - core index']
  #allocation1 [shape = 'u32[144,128]{1,0:T(1,128)}', space=vmem, size = 0x12000, scoped, tag = 'internal scratch']
  %s0 = inlined_call_operand.vmem [shape: bf16[2,14,128], index: 0, kind: input, shape index: {}]
  %s1 = inlined_call_operand.vmem [shape: bf16[2,14,128], index: 1, kind: input, shape index: {}]
  %s2 = inlined_call_operand.vmem [shape: f32[2,128], index: 2, kind: input, shape index: {}]
  %s3 = inlined_call_operand.vmem [shape: bf16[128,128], index: 3, kind: input, shape index: {}]
  %s4 = inlined_call_operand.hbm [shape: bf16[128,128], index: 4, kind: input, shape index: {}]
  %s5 = inlined_call_operand.vmem [shape: f32[1,128], index: 5, kind: input, shape index: {}]
  %s6 = inlined_call_operand.hbm [shape: f32[2,128], index: 6, kind: output, shape index: {}]
  %s7 = sld [smem:[#allocation0]]
  $region38: #{tpu_custom_call.1} parent=0
    _
  %s9 = ssub.s32 1, %s7
  %s10 = scalar_select 0, %s9, %s7
  $region1: #{tpu_custom_call.1} parent=0
    #allocation2 [shape = 'u8[32768]{0}', space=vmem, size = 0x8000, scoped, tag = 'input window, operand 4, single buffered']
    #allocation3 [shape = 's32[1]{0}', space=sflag, size = 0x4, scoped, tag = 'scoped memory for tpu_custom_call.1']
    #allocation4 [shape = 's32[1]{0}', space=sflag, size = 0x4, scoped, tag = 'scoped memory for tpu_custom_call.1']
    #allocation5 [shape = 'u8[1024]{0}', space=vmem, size = 0x400, scoped, tag = 'output window, operand 0, single buffered']
    %11 = vsyncpa [#allocation3], 0
    %12 = vsyncpa [#allocation4], 0
    // Predicated region
    $region2: #{tpu_custom_call.1} parent=1 // pred_check
      _
    $region3: #{tpu_custom_call.1} parent=1 // pred_check_branch
      %14 = sbr.rel (0) target = $region5
    $region4: #{tpu_custom_call.1} parent=1 // pred_region
      _
    $region5: #{tpu_custom_call.1} parent=1 // pred_fallthru
      _
    // Predicated region
    $region6: #{tpu_custom_call.1} parent=1 // pred_check
      _
    $region7: #{tpu_custom_call.1} parent=1 // pred_check_branch
      %16 = sbr.rel (0) target = $region9
    $region8: #{tpu_custom_call.1} parent=1 // pred_region
      _
    $region9: #{tpu_custom_call.1} parent=1 // pred_fallthru
      _
    // Predicated region
    $region10: #{tpu_custom_call.1} parent=1 // pred_check
      _
    $region11: #{tpu_custom_call.1} parent=1 // pred_check_branch
      %18 = sbr.rel (0) target = $region13
    $region12: #{tpu_custom_call.1} parent=1 // pred_region
      _
    $region13: #{tpu_custom_call.1} parent=1 // pred_fallthru
      _
    // Predicated region
    $region14: #{tpu_custom_call.1} parent=1 // pred_check
      _
    $region15: #{tpu_custom_call.1} parent=1 // pred_check_branch
      %20 = sbr.rel (0) target = $region17
    $region16: #{tpu_custom_call.1} parent=1 // pred_region
      _
    $region17: #{tpu_custom_call.1} parent=1 // pred_fallthru
      _
    // Predicated region
    $region18: #{tpu_custom_call.1} parent=1 // pred_check
      _
    $region19: #{tpu_custom_call.1} parent=1 // pred_check_branch
      %22 = sbr.rel (0) target = $region21
    $region20: #{tpu_custom_call.1} parent=1 // pred_region
      %s24 = ssub.s32 1024, 1024
      %25 = vsyncadd [#allocation3], %s24
      %s26 = sshll.u32 [#allocation2], 4
      %s27 = int_to_ptr.vmem [resolvable:$true] %s26
      %32 = dma.hbm_to_vmem [thread:$0]  %s4, 1024, %s27, [#allocation3], 64, 64, 4
    $region21: #{tpu_custom_call.1} parent=1 // pred_fallthru
      _
    // Predicated region
    $region22: #{tpu_custom_call.1} parent=1 // pred_check
      _
    $region23: #{tpu_custom_call.1} parent=1 // pred_check_branch
      %34 = sbr.rel (0) target = $region25
    $region24: #{tpu_custom_call.1} parent=1 // pred_region
      _
    $region25: #{tpu_custom_call.1} parent=1 // pred_fallthru
      _
    // Predicated region
    $region26: #{tpu_custom_call.1} parent=1 // pred_check
      _
    $region27: #{tpu_custom_call.1} parent=1 // pred_check_branch
      %36 = sbr.rel (0) target = $region29
    $region28: #{tpu_custom_call.1} parent=1 // pred_region
      %37 = dma.done [#allocation3], 1024
    $region29: #{tpu_custom_call.1} parent=1 // pred_fallthru
      _
    %v39 = vld [vmem:[%s1] sm:$0x1]
    %v40 = vld [vmem:[%s1 + $0x8] sm:$0x1]
    %v41 = vunpack.c.l.bf16 %v39
    %v42 = vunpack.c.l.bf16 %v40
    %v45 = vrot.slane %v41, 1
    %v46 = vrot.slane %v42, 1
    %v49 = vadd.f32 %v41, %v45
    %v50 = vadd.f32 %v42, %v46
    %v51 = vld [vmem:[%s1] sm:$0x2]
    %v52 = vld [vmem:[%s1 + $0x8] sm:$0x2]
    %v53 = vunpack.c.l.bf16 %v51
    %v54 = vunpack.c.l.bf16 %v52
    %v57 = vrot.slane %v53, 2
    %v58 = vrot.slane %v54, 2
    %v61 = vadd.f32 %v49, %v57
    %v62 = vadd.f32 %v50, %v58
    %v63 = vrot.slane %v53, 3
    %v64 = vrot.slane %v54, 3
    %v67 = vadd.f32 %v61, %v63
    %v68 = vadd.f32 %v62, %v64
    %v69 = vld [vmem:[%s1] sm:$0x4]
    %v70 = vld [vmem:[%s1 + $0x8] sm:$0x4]
    %v71 = vunpack.c.l.bf16 %v69
    %v72 = vunpack.c.l.bf16 %v70
    %v75 = vrot.slane %v71, 4
    %v76 = vrot.slane %v72, 4
    %v79 = vadd.f32 %v67, %v75
    %v80 = vadd.f32 %v68, %v76
    %v81 = vrot.slane %v71, 5
    %v82 = vrot.slane %v72, 5
    %v85 = vadd.f32 %v79, %v81
    %v86 = vadd.f32 %v80, %v82
    %v87 = vld [vmem:[%s1] sm:$0x8]
    %v88 = vld [vmem:[%s1 + $0x8] sm:$0x8]
    %v89 = vunpack.c.l.bf16 %v87
    %v90 = vunpack.c.l.bf16 %v88
    %v93 = vrot.slane %v89, 6
    %v94 = vrot.slane %v90, 6
    %v97 = vadd.f32 %v85, %v93
    %v98 = vadd.f32 %v86, %v94
    %v99 = vrot.slane %v89, 7
    %v100 = vrot.slane %v90, 7
    %v103 = vadd.f32 %v97, %v99
    %v104 = vadd.f32 %v98, %v100
    %v105 = vld [vmem:[%s1 + $0x4] sm:$0x1]
    %v106 = vld [vmem:[%s1 + $0xc] sm:$0x1]
    %v107 = vunpack.c.l.bf16 %v105
    %v108 = vunpack.c.l.bf16 %v106
    %v109 = vadd.f32 %v103, %v107
    %v110 = vadd.f32 %v104, %v108
    %v113 = vrot.slane %v107, 1
    %v114 = vrot.slane %v108, 1
    %v117 = vadd.f32 %v109, %v113
    %v118 = vadd.f32 %v110, %v114
    %v119 = vld [vmem:[%s1 + $0x4] sm:$0x2]
    %v120 = vld [vmem:[%s1 + $0xc] sm:$0x2]
    %v121 = vunpack.c.l.bf16 %v119
    %v122 = vunpack.c.l.bf16 %v120
    %v125 = vrot.slane %v121, 2
    %v126 = vrot.slane %v122, 2
    %v129 = vadd.f32 %v117, %v125
    %v130 = vadd.f32 %v118, %v126
    %v131 = vrot.slane %v121, 3
    %v132 = vrot.slane %v122, 3
    %v135 = vadd.f32 %v129, %v131
    %v136 = vadd.f32 %v130, %v132
    %v137 = vld [vmem:[%s1 + $0x4] sm:$0x4]
    %v138 = vld [vmem:[%s1 + $0xc] sm:$0x4]
    %v139 = vunpack.c.l.bf16 %v137
    %v140 = vunpack.c.l.bf16 %v138
    %v143 = vrot.slane %v139, 4
    %v144 = vrot.slane %v140, 4
    %v147 = vadd.f32 %v135, %v143
    %v148 = vadd.f32 %v136, %v144
    %v149 = vrot.slane %v139, 5
    %v150 = vrot.slane %v140, 5
    %v153 = vadd.f32 %v147, %v149
    %v154 = vadd.f32 %v148, %v150
    %v155 = vld [vmem:[%s0] sm:$0x1]
    %v156 = vld [vmem:[%s0 + $0x8] sm:$0x1]
    %v157 = vunpack.c.l.bf16 %v155
    %v158 = vunpack.c.l.bf16 %v156
    %v161 = vrot.slane %v157, 1
    %v162 = vrot.slane %v158, 1
    %v165 = vadd.f32 %v157, %v161
    %v166 = vadd.f32 %v158, %v162
    %v167 = vld [vmem:[%s0] sm:$0x2]
    %v168 = vld [vmem:[%s0 + $0x8] sm:$0x2]
    %v169 = vunpack.c.l.bf16 %v167
    %v170 = vunpack.c.l.bf16 %v168
    %v173 = vrot.slane %v169, 2
    %v174 = vrot.slane %v170, 2
    %v177 = vadd.f32 %v165, %v173
    %v178 = vadd.f32 %v166, %v174
    %v179 = vrot.slane %v169, 3
    %v180 = vrot.slane %v170, 3
    %v183 = vadd.f32 %v177, %v179
    %v184 = vadd.f32 %v178, %v180
    %v185 = vld [vmem:[%s0] sm:$0x4]
    %v186 = vld [vmem:[%s0 + $0x8] sm:$0x4]
    %v187 = vunpack.c.l.bf16 %v185
    %v188 = vunpack.c.l.bf16 %v186
    %v191 = vrot.slane %v187, 4
    %v192 = vrot.slane %v188, 4
    %v195 = vadd.f32 %v183, %v191
    %v196 = vadd.f32 %v184, %v192
    %v197 = vrot.slane %v187, 5
    %v198 = vrot.slane %v188, 5
    %v201 = vadd.f32 %v195, %v197
    %v202 = vadd.f32 %v196, %v198
    %v203 = vld [vmem:[%s0] sm:$0x8]
    %v204 = vld [vmem:[%s0 + $0x8] sm:$0x8]
    %v205 = vunpack.c.l.bf16 %v203
    %v206 = vunpack.c.l.bf16 %v204
    %v209 = vrot.slane %v205, 6
    %v210 = vrot.slane %v206, 6
    %v213 = vadd.f32 %v201, %v209
    %v214 = vadd.f32 %v202, %v210
    %v215 = vrot.slane %v205, 7
    %v216 = vrot.slane %v206, 7
    %v219 = vadd.f32 %v213, %v215
    %v220 = vadd.f32 %v214, %v216
    %v221 = vld [vmem:[%s0 + $0x4] sm:$0x1]
    %v222 = vld [vmem:[%s0 + $0xc] sm:$0x1]
    %v223 = vunpack.c.l.bf16 %v221
    %v224 = vunpack.c.l.bf16 %v222
    %v225 = vadd.f32 %v219, %v223
    %v226 = vadd.f32 %v220, %v224
    %v229 = vrot.slane %v223, 1
    %v230 = vrot.slane %v224, 1
    %v233 = vadd.f32 %v225, %v229
    %v234 = vadd.f32 %v226, %v230
    %v235 = vld [vmem:[%s0 + $0x4] sm:$0x2]
    %v236 = vld [vmem:[%s0 + $0xc] sm:$0x2]
    %v237 = vunpack.c.l.bf16 %v235
    %v238 = vunpack.c.l.bf16 %v236
    %v241 = vrot.slane %v237, 2
    %v242 = vrot.slane %v238, 2
    %v245 = vadd.f32 %v233, %v241
    %v246 = vadd.f32 %v234, %v242
    %v247 = vrot.slane %v237, 3
    %v248 = vrot.slane %v238, 3
    %v251 = vadd.f32 %v245, %v247
    %v252 = vadd.f32 %v246, %v248
    %v253 = vld [vmem:[%s0 + $0x4] sm:$0x4]
    %v254 = vld [vmem:[%s0 + $0xc] sm:$0x4]
    %v255 = vunpack.c.l.bf16 %v253
    %v256 = vunpack.c.l.bf16 %v254
    %v259 = vrot.slane %v255, 4
    %v260 = vrot.slane %v256, 4
    %v263 = vadd.f32 %v251, %v259
    %v264 = vadd.f32 %v252, %v260
    %v265 = vrot.slane %v255, 5
    %v266 = vrot.slane %v256, 5
    %v269 = vadd.f32 %v263, %v265
    %v270 = vadd.f32 %v264, %v266
    %v271 = vmul.f32 %v269, 0.071428575
    %v272 = vmul.f32 %v270, 0.071428575
    %v273 = vpack.c.bf16 %v153, %v153
    %v274 = vpack.c.bf16 %v154, %v154
    %v275 = vld [vmem:[%s3] sm:$0xf]
    %v276 = vld [vmem:[%s3 + $0x4] sm:$0xf]
    %v277 = vld [vmem:[%s3 + $0x8] sm:$0xf]
    %v278 = vld [vmem:[%s3 + $0xc] sm:$0xf]
    %v279 = vld [vmem:[%s3 + $0x10] sm:$0xf]
    %v280 = vld [vmem:[%s3 + $0x14] sm:$0xf]
    %v281 = vld [vmem:[%s3 + $0x18] sm:$0xf]
    %v282 = vld [vmem:[%s3 + $0x1c] sm:$0xf]
    %v283 = vld [vmem:[%s3 + $0x20] sm:$0xf]
    %v284 = vld [vmem:[%s3 + $0x24] sm:$0xf]
    %v285 = vld [vmem:[%s3 + $0x28] sm:$0xf]
    %v286 = vld [vmem:[%s3 + $0x2c] sm:$0xf]
    %v287 = vld [vmem:[%s3 + $0x30] sm:$0xf]
    %v288 = vld [vmem:[%s3 + $0x34] sm:$0xf]
    %v289 = vld [vmem:[%s3 + $0x38] sm:$0xf]
    %v290 = vld [vmem:[%s3 + $0x3c] sm:$0xf]
    %v291 = vld [vmem:[%s2] sm:$0x3]
    %v294 = vunpack.c.l.b16 %v273
    %v295 = vunpack.c.l.b16 %v274
    %v296 = vrot.slane %v295, 7
    %vm297 = vcmask 1041409
    %v298 = vsel %vm297, %v296, %v294
    %v299 = vpack.c.b16 %v298, %v298
    %v317 = vunpack.c.l.b16 %v275
    %v318 = vunpack.c.l.b16 %v276
    %v319 = vunpack.c.l.b16 %v277
    %v320 = vunpack.c.l.b16 %v278
    %v321 = vunpack.c.l.b16 %v279
    %v322 = vunpack.c.l.b16 %v280
    %v323 = vunpack.c.l.b16 %v281
    %v324 = vunpack.c.l.b16 %v282
    %v325 = vunpack.c.l.b16 %v283
    %v326 = vunpack.c.l.b16 %v284
    %v327 = vunpack.c.l.b16 %v285
    %v328 = vunpack.c.l.b16 %v286
    %v329 = vunpack.c.l.b16 %v287
    %v330 = vunpack.c.l.b16 %v288
    %v331 = vunpack.c.l.b16 %v289
    %v332 = vunpack.c.l.b16 %v290
    %v333 = vpack.c.b16 %v318, %v317
    %v334 = vpack.c.b16 %v320, %v319
    %v335 = vpack.c.b16 %v322, %v321
    %v336 = vpack.c.b16 %v324, %v323
    %v337 = vpack.c.b16 %v326, %v325
    %v338 = vpack.c.b16 %v328, %v327
    %v339 = vpack.c.b16 %v330, %v329
    %v340 = vpack.c.b16 %v332, %v331
    %349 = vmatprep.subr.bf16.mxu0 0
    %350 = vmatpush1.bf16.msra.mxu0 %v333
    %351 = vmatprep.subr.bf16.mxu0 0
    %352 = vmatpush1.bf16.msra.mxu0 %v334
    %353 = vmatprep.subr.bf16.mxu0 0
    %354 = vmatpush1.bf16.msra.mxu0 %v335
    %355 = vmatprep.subr.bf16.mxu0 0
    %356 = vmatpush1.bf16.msra.mxu0 %v336
    %357 = vmatprep.subr.bf16.mxu0 0
    %358 = vmatpush1.bf16.msra.mxu0 %v337
    %359 = vmatprep.subr.bf16.mxu0 0
    %360 = vmatpush1.bf16.msra.mxu0 %v338
    %361 = vmatprep.subr.bf16.mxu0 0
    %362 = vmatpush1.bf16.msra.mxu0 %v339
    %363 = vmatprep.subr.bf16.mxu0 0
    %364 = vmatpush1.bf16.msra.mxu0 %v340
    %365 = vmatprep.subr.bf16.mxu0 0
    %366 = vmatpush1.bf16.msra.mxu0 0
    %367 = vmatprep.subr.bf16.mxu0 0
    %368 = vmatpush1.bf16.msra.mxu0 0
    %369 = vmatprep.subr.bf16.mxu0 0
    %370 = vmatpush1.bf16.msra.mxu0 0
    %371 = vmatprep.subr.bf16.mxu0 0
    %372 = vmatpush1.bf16.msra.mxu0 0
    %373 = vmatprep.subr.bf16.mxu0 0
    %374 = vmatpush1.bf16.msra.mxu0 0
    %375 = vmatprep.subr.bf16.mxu0 0
    %376 = vmatpush1.bf16.msra.mxu0 0
    %377 = vmatprep.subr.bf16.mxu0 0
    %378 = vmatpush1.bf16.msra.mxu0 0
    %379 = vmatprep.subr.bf16.mxu0 0
    %380 = vmatpush1.bf16.msra.mxu0 0
    %381 = vmatprep.mubr.bf16.mxu0 0
    %382 = vmatmul.mubr.bf16.gmra.mrb[0].mxu0 %v299
    %v383 = vpop.f32.mrb[0].mxu0
    %v384 = vadd.f32 %v291, %v383
    %v385 = vpop.f32.mrb[0].mxu0
    %v386 = vpop.f32.mrb[0].mxu0
    %v387 = vpop.f32.mrb[0].mxu0
    %388 = vdwg.mxu0
    %v389 = vxor.u32 %v384, 2147483648
    %v390 = vmul.f32 %v389, 1.442695
    %v391 = vpow.pop %v390
    %v392 = vadd.f32 %v391, 1.0
    %v393 = vrcp.pop %v392
    %v394 = vmul.f32 1.0, %v393
    %v395 = vpack.c.bf16 %v394, %v394
    %v396 = vld [vmem:[#allocation2] sm:$0xf]
    %v397 = vld [vmem:[#allocation2 + $0x4] sm:$0xf]
    %v398 = vld [vmem:[#allocation2 + $0x8] sm:$0xf]
    %v399 = vld [vmem:[#allocation2 + $0xc] sm:$0xf]
    %v400 = vld [vmem:[#allocation2 + $0x10] sm:$0xf]
    %v401 = vld [vmem:[#allocation2 + $0x14] sm:$0xf]
    %v402 = vld [vmem:[#allocation2 + $0x18] sm:$0xf]
    %v403 = vld [vmem:[#allocation2 + $0x1c] sm:$0xf]
    %v404 = vld [vmem:[#allocation2 + $0x20] sm:$0xf]
    %v405 = vld [vmem:[#allocation2 + $0x24] sm:$0xf]
    %v406 = vld [vmem:[#allocation2 + $0x28] sm:$0xf]
    %v407 = vld [vmem:[#allocation2 + $0x2c] sm:$0xf]
    %v408 = vld [vmem:[#allocation2 + $0x30] sm:$0xf]
    %v409 = vld [vmem:[#allocation2 + $0x34] sm:$0xf]
    %v410 = vld [vmem:[#allocation2 + $0x38] sm:$0xf]
    %v411 = vld [vmem:[#allocation2 + $0x3c] sm:$0xf]
    %v412 = vld [vmem:[%s5] sm:$0x1]
    %v414 = vlaneseq
    %v415 = vshrl.u32 %v414, 7
    %v416 = vsub.s32 0, %v415
    %v417 = vrot.slane %v412, %v416
    %v435 = vunpack.c.l.b16 %v396
    %v436 = vunpack.c.l.b16 %v397
    %v437 = vunpack.c.l.b16 %v398
    %v438 = vunpack.c.l.b16 %v399
    %v439 = vunpack.c.l.b16 %v400
    %v440 = vunpack.c.l.b16 %v401
    %v441 = vunpack.c.l.b16 %v402
    %v442 = vunpack.c.l.b16 %v403
    %v443 = vunpack.c.l.b16 %v404
    %v444 = vunpack.c.l.b16 %v405
    %v445 = vunpack.c.l.b16 %v406
    %v446 = vunpack.c.l.b16 %v407
    %v447 = vunpack.c.l.b16 %v408
    %v448 = vunpack.c.l.b16 %v409
    %v449 = vunpack.c.l.b16 %v410
    %v450 = vunpack.c.l.b16 %v411
    %v451 = vpack.c.b16 %v436, %v435
    %v452 = vpack.c.b16 %v438, %v437
    %v453 = vpack.c.b16 %v440, %v439
    %v454 = vpack.c.b16 %v442, %v441
    %v455 = vpack.c.b16 %v444, %v443
    %v456 = vpack.c.b16 %v446, %v445
    %v457 = vpack.c.b16 %v448, %v447
    %v458 = vpack.c.b16 %v450, %v449
    %467 = vmatprep.subr.bf16.mxu0 0
    %468 = vmatpush1.bf16.msra.mxu0 %v451
    %469 = vmatprep.subr.bf16.mxu0 0
    %470 = vmatpush1.bf16.msra.mxu0 %v452
    %471 = vmatprep.subr.bf16.mxu0 0
    %472 = vmatpush1.bf16.msra.mxu0 %v453
    %473 = vmatprep.subr.bf16.mxu0 0
    %474 = vmatpush1.bf16.msra.mxu0 %v454
    %475 = vmatprep.subr.bf16.mxu0 0
    %476 = vmatpush1.bf16.msra.mxu0 %v455
    %477 = vmatprep.subr.bf16.mxu0 0
    %478 = vmatpush1.bf16.msra.mxu0 %v456
    %479 = vmatprep.subr.bf16.mxu0 0
    %480 = vmatpush1.bf16.msra.mxu0 %v457
    %481 = vmatprep.subr.bf16.mxu0 0
    %482 = vmatpush1.bf16.msra.mxu0 %v458
    %483 = vmatprep.subr.bf16.mxu0 0
    %484 = vmatpush1.bf16.msra.mxu0 0
    %485 = vmatprep.subr.bf16.mxu0 0
    %486 = vmatpush1.bf16.msra.mxu0 0
    %487 = vmatprep.subr.bf16.mxu0 0
    %488 = vmatpush1.bf16.msra.mxu0 0
    %489 = vmatprep.subr.bf16.mxu0 0
    %490 = vmatpush1.bf16.msra.mxu0 0
    %491 = vmatprep.subr.bf16.mxu0 0
    %492 = vmatpush1.bf16.msra.mxu0 0
    %493 = vmatprep.subr.bf16.mxu0 0
    %494 = vmatpush1.bf16.msra.mxu0 0
    %495 = vmatprep.subr.bf16.mxu0 0
    %496 = vmatpush1.bf16.msra.mxu0 0
    %497 = vmatprep.subr.bf16.mxu0 0
    %498 = vmatpush1.bf16.msra.mxu0 0
    %499 = vmatprep.mubr.bf16.mxu0 0
    %500 = vmatmul.mubr.bf16.gmra.mrb[0].mxu0 %v395
    %v501 = vpop.f32.mrb[0].mxu0
    %v502 = vadd.f32 %v417, %v501
    %v503 = vpop.f32.mrb[0].mxu0
    %v504 = vpop.f32.mrb[0].mxu0
    %v505 = vpop.f32.mrb[0].mxu0
    %506 = vdwg.mxu0
    %v507 = vxor.u32 %v502, 2147483648
    %v508 = vmul.f32 %v507, 1.442695
    %v509 = vpow.pop %v508
    %v510 = vadd.f32 %v509, 1.0
    %v511 = vrcp.pop %v510
    %v512 = vmul.f32 1.0, %v511
    %v513 = vxor.u32 %v271, 2147483648
    %v514 = vxor.u32 %v272, 2147483648
    %v515 = vmul.f32 %v513, 1.442695
    %v516 = vpow.pop %v515
    %v517 = vmul.f32 %v514, 1.442695
    %v518 = vpow.pop %v517
    %v519 = vadd.f32 %v516, 1.0
    %v520 = vadd.f32 %v518, 1.0
    %v521 = vrcp.pop %v519
    %v522 = vmul.f32 1.0, %v521
    %v523 = vrcp.pop %v520
    %v524 = vmul.f32 1.0, %v523
    %v526 = vrot.slane %v512, 1
    %v529 = vmul.f32 %v522, %v512
    %v530 = vmul.f32 %v524, %v526
    %v533 = vrot.slane %v530, 7
    %v534 = vsel %vm297, %v533, %v529
    %536 = vst [vmem:[#allocation5] sm:$0x3] %v534
    // Predicated region
    $region30: #{tpu_custom_call.1} parent=1 // pred_check
      _
    $region31: #{tpu_custom_call.1} parent=1 // pred_check_branch
      %538 = sbr.rel (0) target = $region33
    $region32: #{tpu_custom_call.1} parent=1 // pred_region
      %s540 = ssub.s32 32, 32
      %541 = vsyncadd [#allocation4], %s540
      %s543 = sshll.u32 [#allocation5], 4
      %s544 = int_to_ptr.vmem [resolvable:$true] %s543
      %546 = dma.vmem_to_hbm [thread:$0]  %s544, 32, %s6, [#allocation4]
    $region33: #{tpu_custom_call.1} parent=1 // pred_fallthru
      _
    // Predicated region
    $region34: #{tpu_custom_call.1} parent=1 // pred_check
      _
    $region35: #{tpu_custom_call.1} parent=1 // pred_check_branch
      %548 = sbr.rel (0) target = $region37
    $region36: #{tpu_custom_call.1} parent=1 // pred_region
      %549 = dma.done [#allocation4], 32
    $region37: #{tpu_custom_call.1} parent=1 // pred_fallthru
      _
    %550 = vsyncpa [#allocation3], 1
    %551 = vsyncpa [#allocation4], 1

</llo_original>
